<compile_context>
chip_gen: v5e
topology: v5e:2x2
jax: 0.10.0
libtpu: 0.0.40
codegen_flags: <defaults>
</compile_context>

<pallas_src>
import functools

import jax
import jax.numpy as jnp
from jax import lax
from jax.experimental import pallas as pl
from jax.experimental.pallas import tpu as pltpu


def _same_pad_amounts(k):
    # Mirrors the PyTorch module: (k // 2 + (k - 2 * (k // 2)) - 1, k // 2)
    return (k // 2 + (k - 2 * (k // 2)) - 1, k // 2)


def _conv_relu_bn_kernel(x_ref, w_ref, hw_ref, gamma_ref, beta_ref, out_ref,
                         patch_ref, *, img_h, img_w, KH, KW, h_lo, w_lo, eps):
    """Whole-problem kernel (everything VMEM resident at these sizes).

    x_ref:     (Cin, M)            activations, M = N*H*W on the lane axis
    w_ref:     (Cout, KH*KW*Cin)   weights, K ordered (kh, kw, cin)
    hw_ref:    (2, M) int32        row 0 = h coord, row 1 = w coord per lane
    gamma_ref: (Cout, 1)
    beta_ref:  (Cout, 1)
    out_ref:   (Cout, M)
    patch_ref: (KH*KW*Cin, M)      VMEM im2col scratch
    """
    Cin, M = x_ref.shape

    x = x_ref[...]
    hh = hw_ref[0:1, :]          # (1, M) int32, h coordinate of each lane
    ww = hw_ref[1:2, :]          # (1, M) int32, w coordinate of each lane

    # In-kernel im2col: each tap is a circular lane roll of x (XLU slot),
    # with out-of-image lanes zeroed by a boundary mask computed on the fly
    # from the lane coordinates (implements the ZeroPad2d semantics without a
    # padded HBM copy and without shipping KH*KW*M floats of mask from HBM).
    for kh in range(KH):
        dh = kh - h_lo
        for kw in range(KW):
            dw = kw - w_lo
            t = kh * KW + kw
            # shifted[q] = x[q + dh*W + dw]  (wrap-around lanes are masked off)
            shift = (-(dh * img_w + dw)) % M
            shifted = pltpu.roll(x, shift, 1) if shift != 0 else x
            valid = ((hh >= -dh) & (hh < img_h - dh) &
                     (ww >= -dw) & (ww < img_w - dw))        # (1, M) bool
            patch_ref[t * Cin:(t + 1) * Cin, :] = (
                shifted * valid.astype(x.dtype))             # sublane bcast

    # Single MXU contraction, f32 accumulation, lane-dense (Cout, M) result.
    acc = jnp.dot(w_ref[...], patch_ref[...],
                  preferred_element_type=jnp.float32)

    # ReLU before BN (matches the PyTorch forward order).
    r = jnp.maximum(acc, 0.0)

    # BatchNorm2d (training mode): biased batch statistics per channel over
    # N*H*W, single pass (sum + sum-of-squares), affine folded into one FMA.
    inv_cnt = 1.0 / float(M)
    s1 = jnp.sum(r, axis=1, keepdims=True)               # (Cout, 1)
    s2 = jnp.sum(r * r, axis=1, keepdims=True)           # (Cout, 1)
    mean = s1 * inv_cnt
    var = jnp.maximum(s2 * inv_cnt - mean * mean, 0.0)   # biased variance
    a = gamma_ref[...] * lax.rsqrt(var + eps)            # (Cout, 1)
    b = beta_ref[...] - mean * a                         # (Cout, 1)
    out_ref[...] = (r * a + b).astype(out_ref.dtype)


@functools.partial(jax.jit, static_argnames=("kernel_size",))
def basic_conv2d(x_nchw, weight_oihw, gamma, beta, kernel_size):
    """Forward of BasicConv2d.  x_nchw: (N, Cin, H, W) -> (N, Cout, H, W)."""
    KH, KW = kernel_size
    h_lo, _h_hi = _same_pad_amounts(KH)   # ZeroPad2d (top, bottom)
    w_lo, _w_hi = _same_pad_amounts(KW)   # ZeroPad2d (left, right)

    N, Cin, H, W = x_nchw.shape
    Cout = weight_oihw.shape[0]
    M = N * H * W
    K = KH * KW * Cin

    # Wrapper-side layout plumbing (blessed: lane-dense kernel slab), tiny:
    # channels on sublanes, batch*spatial on lanes; weights flattened to
    # (Cout, KH*KW*Cin) with K ordered (kh, kw, cin).
    x_cm = jnp.transpose(x_nchw, (1, 0, 2, 3)).reshape(Cin, M)
    w_flat = jnp.transpose(weight_oihw, (0, 2, 3, 1)).reshape(Cout, K)

    # Per-lane (h, w) coordinates (shape-derived constants, folded at trace
    # time) — 2 int32 rows instead of KH*KW f32 mask rows of HBM traffic.
    p = jnp.arange(H * W, dtype=jnp.int32)
    hw = jnp.stack([jnp.tile(p // W, N), jnp.tile(p % W, N)], axis=0)  # (2, M)

    kern = functools.partial(_conv_relu_bn_kernel, img_h=H, img_w=W, KH=KH,
                             KW=KW, h_lo=h_lo, w_lo=w_lo, eps=1e-5)
    vmem = pl.BlockSpec(memory_space=pltpu.MemorySpace.VMEM)
    out_cm = pl.pallas_call(
        kern,
        out_shape=jax.ShapeDtypeStruct((Cout, M), x_nchw.dtype),
        in_specs=[vmem, vmem, vmem, vmem, vmem],
        out_specs=vmem,
        scratch_shapes=[pltpu.VMEM((K, M), x_nchw.dtype)],
    )(x_cm, w_flat, hw, gamma.reshape(Cout, 1), beta.reshape(Cout, 1))

    # (Cout, N*H*W) -> (N, Cout, H, W)
    return jnp.transpose(out_cm.reshape(Cout, N, H, W), (1, 0, 2, 3))


def _reference(x_nchw, weight_oihw, gamma, beta, kernel_size):
    """Pure-JAX reference for correctness checking."""
    KH, KW = kernel_size
    h_lo, h_hi = _same_pad_amounts(KH)
    w_lo, w_hi = _same_pad_amounts(KW)
    xp = jnp.pad(x_nchw, ((0, 0), (0, 0), (h_lo, h_hi), (w_lo, w_hi)))
    y = lax.conv_general_dilated(
        xp, weight_oihw, window_strides=(1, 1), padding="VALID",
        dimension_numbers=("NCHW", "OIHW", "NCHW"),
        preferred_element_type=jnp.float32)
    r = jnp.maximum(y, 0.0)
    mean = r.mean(axis=(0, 2, 3), keepdims=True)
    var = ((r - mean) ** 2).mean(axis=(0, 2, 3), keepdims=True)
    g = gamma.reshape(1, -1, 1, 1)
    b = beta.reshape(1, -1, 1, 1)
    return ((r - mean) * lax.rsqrt(var + 1e-5) * g + b).astype(x_nchw.dtype)


if __name__ == "__main__":
    # Small shapes: batch=2, in_channels=4, out_channels=8, spatial=16x16,
    # kernel_size=(3, 3).
    N, CIN, COUT, H, W = 2, 4, 8, 16, 16
    KSIZE = (3, 3)

    key = jax.random.PRNGKey(0)
    key_x, key_w, key_g, key_b = jax.random.split(key, 4)
    x = jax.random.normal(key_x, (N, CIN, H, W), dtype=jnp.float32)
    # Conv2d weight (out, in, KH, KW), bias=False.
    weight = jax.random.normal(key_w, (COUT, CIN, *KSIZE), dtype=jnp.float32) * 0.1
    # BatchNorm affine params (deterministic, slightly non-trivial).
    gamma = 1.0 + 0.05 * jax.random.normal(key_g, (COUT,), dtype=jnp.float32)
    beta = 0.05 * jax.random.normal(key_b, (COUT,), dtype=jnp.float32)

    out = basic_conv2d(x, weight, gamma, beta, KSIZE)
    out = jax.block_until_ready(out)

    ref = _reference(x, weight, gamma, beta, KSIZE)
    assert out.shape == (N, COUT, H, W), out.shape
    max_err = float(jnp.max(jnp.abs(out - ref)))
    assert jnp.allclose(out, ref, atol=2e-3, rtol=2e-3), max_err

    # Extra check: even kernel size exercises the module's asymmetric
    # ZeroPad2d padding (pad_top != pad_bottom).
    KSIZE2 = (2, 2)
    weight2 = jax.random.normal(key_w, (COUT, CIN, *KSIZE2),
                                dtype=jnp.float32) * 0.1
    out2 = jax.block_until_ready(basic_conv2d(x, weight2, gamma, beta, KSIZE2))
    ref2 = _reference(x, weight2, gamma, beta, KSIZE2)
    max_err2 = float(jnp.max(jnp.abs(out2 - ref2)))
    assert jnp.allclose(out2, ref2, atol=2e-3, rtol=2e-3), max_err2

    print("KERNEL_OK")
</pallas_src>

<mosaic_0001>
module attributes {stable_mosaic.version = 11 : i64} {
  func.func @_conv_relu_bn_kernel(%arg0: memref<4x512xf32, #tpu.memory_space<vmem>>, %arg1: memref<8x36xf32, #tpu.memory_space<vmem>>, %arg2: memref<2x512xi32, #tpu.memory_space<vmem>>, %arg3: memref<8x1xf32, #tpu.memory_space<vmem>>, %arg4: memref<8x1xf32, #tpu.memory_space<vmem>>, %arg5: memref<8x512xf32, #tpu.memory_space<vmem>>, %arg6: memref<36x512xf32, #tpu.memory_space<vmem>>) attributes {dimension_semantics = [], scalar_prefetch = 0 : i64, scratch_operands = 1 : i64, tpu.core_type = #tpu.core_type<tc>} {
    %c0 = arith.constant 0 : index
    %c0_0 = arith.constant 0 : index
    %0 = vector.load %arg0[%c0, %c0_0] : memref<4x512xf32, #tpu.memory_space<vmem>>, vector<4x512xf32>
    %c0_1 = arith.constant 0 : index
    %c0_2 = arith.constant 0 : index
    %1 = vector.load %arg2[%c0_1, %c0_2] : memref<2x512xi32, #tpu.memory_space<vmem>>, vector<1x512xi32>
    %c1 = arith.constant 1 : index
    %c0_3 = arith.constant 0 : index
    %2 = vector.load %arg2[%c1, %c0_3] : memref<2x512xi32, #tpu.memory_space<vmem>>, vector<1x512xi32>
    %c17_i32 = arith.constant 17 : i32
    %3 = tpu.dynamic_rotate %0 by %c17_i32 dim 1 : vector<4x512xf32>, i32 -> vector<4x512xf32>
    %c1_i32 = arith.constant 1 : i32
    %4 = vector.broadcast %c1_i32 : i32 to vector<1x512xi32>
    %5 = arith.cmpi sge, %1, %4 : vector<1x512xi32>
    %c17_i32_4 = arith.constant 17 : i32
    %6 = vector.broadcast %c17_i32_4 : i32 to vector<1x512xi32>
    %7 = arith.cmpi slt, %1, %6 : vector<1x512xi32>
    %8 = arith.andi %5, %7 : vector<1x512xi1>
    %c1_i32_5 = arith.constant 1 : i32
    %9 = vector.broadcast %c1_i32_5 : i32 to vector<1x512xi32>
    %10 = arith.cmpi sge, %2, %9 : vector<1x512xi32>
    %11 = arith.andi %8, %10 : vector<1x512xi1>
    %c17_i32_6 = arith.constant 17 : i32
    %12 = vector.broadcast %c17_i32_6 : i32 to vector<1x512xi32>
    %13 = arith.cmpi slt, %2, %12 : vector<1x512xi32>
    %14 = arith.andi %11, %13 : vector<1x512xi1>
    %15 = arith.extui %14 : vector<1x512xi1> to vector<1x512xi32>
    %16 = arith.sitofp %15 : vector<1x512xi32> to vector<1x512xf32>
    %17 = vector.broadcast %16 : vector<1x512xf32> to vector<4x512xf32>
    %18 = arith.mulf %3, %17 : vector<4x512xf32>
    %c0_7 = arith.constant 0 : index
    %c0_8 = arith.constant 0 : index
    %19 = vector.load %arg6[%c0_7, %c0_8] : memref<36x512xf32, #tpu.memory_space<vmem>>, vector<4x512xf32>
    tpu.vector_store %arg6[%c0_7, %c0_8], %18 {strides = array<i32>} : memref<36x512xf32, #tpu.memory_space<vmem>>, vector<4x512xf32>,
    %c16_i32 = arith.constant 16 : i32
    %20 = tpu.dynamic_rotate %0 by %c16_i32 dim 1 : vector<4x512xf32>, i32 -> vector<4x512xf32>
    %c1_i32_9 = arith.constant 1 : i32
    %21 = vector.broadcast %c1_i32_9 : i32 to vector<1x512xi32>
    %22 = arith.cmpi sge, %1, %21 : vector<1x512xi32>
    %c17_i32_10 = arith.constant 17 : i32
    %23 = vector.broadcast %c17_i32_10 : i32 to vector<1x512xi32>
    %24 = arith.cmpi slt, %1, %23 : vector<1x512xi32>
    %25 = arith.andi %22, %24 : vector<1x512xi1>
    %c0_i32 = arith.constant 0 : i32
    %26 = vector.broadcast %c0_i32 : i32 to vector<1x512xi32>
    %27 = arith.cmpi sge, %2, %26 : vector<1x512xi32>
    %28 = arith.andi %25, %27 : vector<1x512xi1>
    %c16_i32_11 = arith.constant 16 : i32
    %29 = vector.broadcast %c16_i32_11 : i32 to vector<1x512xi32>
    %30 = arith.cmpi slt, %2, %29 : vector<1x512xi32>
    %31 = arith.andi %28, %30 : vector<1x512xi1>
    %32 = arith.extui %31 : vector<1x512xi1> to vector<1x512xi32>
    %33 = arith.sitofp %32 : vector<1x512xi32> to vector<1x512xf32>
    %34 = vector.broadcast %33 : vector<1x512xf32> to vector<4x512xf32>
    %35 = arith.mulf %20, %34 : vector<4x512xf32>
    %c4 = arith.constant 4 : index
    %c0_12 = arith.constant 0 : index
    %36 = vector.load %arg6[%c4, %c0_12] : memref<36x512xf32, #tpu.memory_space<vmem>>, vector<4x512xf32>
    tpu.vector_store %arg6[%c4, %c0_12], %35 {strides = array<i32>} : memref<36x512xf32, #tpu.memory_space<vmem>>, vector<4x512xf32>,
    %c15_i32 = arith.constant 15 : i32
    %37 = tpu.dynamic_rotate %0 by %c15_i32 dim 1 : vector<4x512xf32>, i32 -> vector<4x512xf32>
    %c1_i32_13 = arith.constant 1 : i32
    %38 = vector.broadcast %c1_i32_13 : i32 to vector<1x512xi32>
    %39 = arith.cmpi sge, %1, %38 : vector<1x512xi32>
    %c17_i32_14 = arith.constant 17 : i32
    %40 = vector.broadcast %c17_i32_14 : i32 to vector<1x512xi32>
    %41 = arith.cmpi slt, %1, %40 : vector<1x512xi32>
    %42 = arith.andi %39, %41 : vector<1x512xi1>
    %c-1_i32 = arith.constant -1 : i32
    %43 = vector.broadcast %c-1_i32 : i32 to vector<1x512xi32>
    %44 = arith.cmpi sge, %2, %43 : vector<1x512xi32>
    %45 = arith.andi %42, %44 : vector<1x512xi1>
    %c15_i32_15 = arith.constant 15 : i32
    %46 = vector.broadcast %c15_i32_15 : i32 to vector<1x512xi32>
    %47 = arith.cmpi slt, %2, %46 : vector<1x512xi32>
    %48 = arith.andi %45, %47 : vector<1x512xi1>
    %49 = arith.extui %48 : vector<1x512xi1> to vector<1x512xi32>
    %50 = arith.sitofp %49 : vector<1x512xi32> to vector<1x512xf32>
    %51 = vector.broadcast %50 : vector<1x512xf32> to vector<4x512xf32>
    %52 = arith.mulf %37, %51 : vector<4x512xf32>
    %c8 = arith.constant 8 : index
    %c0_16 = arith.constant 0 : index
    %53 = vector.load %arg6[%c8, %c0_16] : memref<36x512xf32, #tpu.memory_space<vmem>>, vector<4x512xf32>
    tpu.vector_store %arg6[%c8, %c0_16], %52 {strides = array<i32>} : memref<36x512xf32, #tpu.memory_space<vmem>>, vector<4x512xf32>,
    %c1_i32_17 = arith.constant 1 : i32
    %54 = tpu.dynamic_rotate %0 by %c1_i32_17 dim 1 : vector<4x512xf32>, i32 -> vector<4x512xf32>
    %c0_i32_18 = arith.constant 0 : i32
    %55 = vector.broadcast %c0_i32_18 : i32 to vector<1x512xi32>
    %56 = arith.cmpi sge, %1, %55 : vector<1x512xi32>
    %c16_i32_19 = arith.constant 16 : i32
    %57 = vector.broadcast %c16_i32_19 : i32 to vector<1x512xi32>
    %58 = arith.cmpi slt, %1, %57 : vector<1x512xi32>
    %59 = arith.andi %56, %58 : vector<1x512xi1>
    %c1_i32_20 = arith.constant 1 : i32
    %60 = vector.broadcast %c1_i32_20 : i32 to vector<1x512xi32>
    %61 = arith.cmpi sge, %2, %60 : vector<1x512xi32>
    %62 = arith.andi %59, %61 : vector<1x512xi1>
    %c17_i32_21 = arith.constant 17 : i32
    %63 = vector.broadcast %c17_i32_21 : i32 to vector<1x512xi32>
    %64 = arith.cmpi slt, %2, %63 : vector<1x512xi32>
    %65 = arith.andi %62, %64 : vector<1x512xi1>
    %66 = arith.extui %65 : vector<1x512xi1> to vector<1x512xi32>
    %67 = arith.sitofp %66 : vector<1x512xi32> to vector<1x512xf32>
    %68 = vector.broadcast %67 : vector<1x512xf32> to vector<4x512xf32>
    %69 = arith.mulf %54, %68 : vector<4x512xf32>
    %c12 = arith.constant 12 : index
    %c0_22 = arith.constant 0 : index
    %70 = vector.load %arg6[%c12, %c0_22] : memref<36x512xf32, #tpu.memory_space<vmem>>, vector<4x512xf32>
    tpu.vector_store %arg6[%c12, %c0_22], %69 {strides = array<i32>} : memref<36x512xf32, #tpu.memory_space<vmem>>, vector<4x512xf32>,
    %c0_i32_23 = arith.constant 0 : i32
    %71 = vector.broadcast %c0_i32_23 : i32 to vector<1x512xi32>
    %72 = arith.cmpi sge, %1, %71 : vector<1x512xi32>
    %c16_i32_24 = arith.constant 16 : i32
    %73 = vector.broadcast %c16_i32_24 : i32 to vector<1x512xi32>
    %74 = arith.cmpi slt, %1, %73 : vector<1x512xi32>
    %75 = arith.andi %72, %74 : vector<1x512xi1>
    %c0_i32_25 = arith.constant 0 : i32
    %76 = vector.broadcast %c0_i32_25 : i32 to vector<1x512xi32>
    %77 = arith.cmpi sge, %2, %76 : vector<1x512xi32>
    %78 = arith.andi %75, %77 : vector<1x512xi1>
    %c16_i32_26 = arith.constant 16 : i32
    %79 = vector.broadcast %c16_i32_26 : i32 to vector<1x512xi32>
    %80 = arith.cmpi slt, %2, %79 : vector<1x512xi32>
    %81 = arith.andi %78, %80 : vector<1x512xi1>
    %82 = arith.extui %81 : vector<1x512xi1> to vector<1x512xi32>
    %83 = arith.sitofp %82 : vector<1x512xi32> to vector<1x512xf32>
    %84 = vector.broadcast %83 : vector<1x512xf32> to vector<4x512xf32>
    %85 = arith.mulf %0, %84 : vector<4x512xf32>
    %c16 = arith.constant 16 : index
    %c0_27 = arith.constant 0 : index
    %86 = vector.load %arg6[%c16, %c0_27] : memref<36x512xf32, #tpu.memory_space<vmem>>, vector<4x512xf32>
    tpu.vector_store %arg6[%c16, %c0_27], %85 {strides = array<i32>} : memref<36x512xf32, #tpu.memory_space<vmem>>, vector<4x512xf32>,
    %c511_i32 = arith.constant 511 : i32
    %87 = tpu.dynamic_rotate %0 by %c511_i32 dim 1 : vector<4x512xf32>, i32 -> vector<4x512xf32>
    %c0_i32_28 = arith.constant 0 : i32
    %88 = vector.broadcast %c0_i32_28 : i32 to vector<1x512xi32>
    %89 = arith.cmpi sge, %1, %88 : vector<1x512xi32>
    %c16_i32_29 = arith.constant 16 : i32
    %90 = vector.broadcast %c16_i32_29 : i32 to vector<1x512xi32>
    %91 = arith.cmpi slt, %1, %90 : vector<1x512xi32>
    %92 = arith.andi %89, %91 : vector<1x512xi1>
    %c-1_i32_30 = arith.constant -1 : i32
    %93 = vector.broadcast %c-1_i32_30 : i32 to vector<1x512xi32>
    %94 = arith.cmpi sge, %2, %93 : vector<1x512xi32>
    %95 = arith.andi %92, %94 : vector<1x512xi1>
    %c15_i32_31 = arith.constant 15 : i32
    %96 = vector.broadcast %c15_i32_31 : i32 to vector<1x512xi32>
    %97 = arith.cmpi slt, %2, %96 : vector<1x512xi32>
    %98 = arith.andi %95, %97 : vector<1x512xi1>
    %99 = arith.extui %98 : vector<1x512xi1> to vector<1x512xi32>
    %100 = arith.sitofp %99 : vector<1x512xi32> to vector<1x512xf32>
    %101 = vector.broadcast %100 : vector<1x512xf32> to vector<4x512xf32>
    %102 = arith.mulf %87, %101 : vector<4x512xf32>
    %c20 = arith.constant 20 : index
    %c0_32 = arith.constant 0 : index
    %103 = vector.load %arg6[%c20, %c0_32] : memref<36x512xf32, #tpu.memory_space<vmem>>, vector<4x512xf32>
    tpu.vector_store %arg6[%c20, %c0_32], %102 {strides = array<i32>} : memref<36x512xf32, #tpu.memory_space<vmem>>, vector<4x512xf32>,
    %c497_i32 = arith.constant 497 : i32
    %104 = tpu.dynamic_rotate %0 by %c497_i32 dim 1 : vector<4x512xf32>, i32 -> vector<4x512xf32>
    %c-1_i32_33 = arith.constant -1 : i32
    %105 = vector.broadcast %c-1_i32_33 : i32 to vector<1x512xi32>
    %106 = arith.cmpi sge, %1, %105 : vector<1x512xi32>
    %c15_i32_34 = arith.constant 15 : i32
    %107 = vector.broadcast %c15_i32_34 : i32 to vector<1x512xi32>
    %108 = arith.cmpi slt, %1, %107 : vector<1x512xi32>
    %109 = arith.andi %106, %108 : vector<1x512xi1>
    %c1_i32_35 = arith.constant 1 : i32
    %110 = vector.broadcast %c1_i32_35 : i32 to vector<1x512xi32>
    %111 = arith.cmpi sge, %2, %110 : vector<1x512xi32>
    %112 = arith.andi %109, %111 : vector<1x512xi1>
    %c17_i32_36 = arith.constant 17 : i32
    %113 = vector.broadcast %c17_i32_36 : i32 to vector<1x512xi32>
    %114 = arith.cmpi slt, %2, %113 : vector<1x512xi32>
    %115 = arith.andi %112, %114 : vector<1x512xi1>
    %116 = arith.extui %115 : vector<1x512xi1> to vector<1x512xi32>
    %117 = arith.sitofp %116 : vector<1x512xi32> to vector<1x512xf32>
    %118 = vector.broadcast %117 : vector<1x512xf32> to vector<4x512xf32>
    %119 = arith.mulf %104, %118 : vector<4x512xf32>
    %c24 = arith.constant 24 : index
    %c0_37 = arith.constant 0 : index
    %120 = vector.load %arg6[%c24, %c0_37] : memref<36x512xf32, #tpu.memory_space<vmem>>, vector<4x512xf32>
    tpu.vector_store %arg6[%c24, %c0_37], %119 {strides = array<i32>} : memref<36x512xf32, #tpu.memory_space<vmem>>, vector<4x512xf32>,
    %c496_i32 = arith.constant 496 : i32
    %121 = tpu.dynamic_rotate %0 by %c496_i32 dim 1 : vector<4x512xf32>, i32 -> vector<4x512xf32>
    %c-1_i32_38 = arith.constant -1 : i32
    %122 = vector.broadcast %c-1_i32_38 : i32 to vector<1x512xi32>
    %123 = arith.cmpi sge, %1, %122 : vector<1x512xi32>
    %c15_i32_39 = arith.constant 15 : i32
    %124 = vector.broadcast %c15_i32_39 : i32 to vector<1x512xi32>
    %125 = arith.cmpi slt, %1, %124 : vector<1x512xi32>
    %126 = arith.andi %123, %125 : vector<1x512xi1>
    %c0_i32_40 = arith.constant 0 : i32
    %127 = vector.broadcast %c0_i32_40 : i32 to vector<1x512xi32>
    %128 = arith.cmpi sge, %2, %127 : vector<1x512xi32>
    %129 = arith.andi %126, %128 : vector<1x512xi1>
    %c16_i32_41 = arith.constant 16 : i32
    %130 = vector.broadcast %c16_i32_41 : i32 to vector<1x512xi32>
    %131 = arith.cmpi slt, %2, %130 : vector<1x512xi32>
    %132 = arith.andi %129, %131 : vector<1x512xi1>
    %133 = arith.extui %132 : vector<1x512xi1> to vector<1x512xi32>
    %134 = arith.sitofp %133 : vector<1x512xi32> to vector<1x512xf32>
    %135 = vector.broadcast %134 : vector<1x512xf32> to vector<4x512xf32>
    %136 = arith.mulf %121, %135 : vector<4x512xf32>
    %c28 = arith.constant 28 : index
    %c0_42 = arith.constant 0 : index
    %137 = vector.load %arg6[%c28, %c0_42] : memref<36x512xf32, #tpu.memory_space<vmem>>, vector<4x512xf32>
    tpu.vector_store %arg6[%c28, %c0_42], %136 {strides = array<i32>} : memref<36x512xf32, #tpu.memory_space<vmem>>, vector<4x512xf32>,
    %c495_i32 = arith.constant 495 : i32
    %138 = tpu.dynamic_rotate %0 by %c495_i32 dim 1 : vector<4x512xf32>, i32 -> vector<4x512xf32>
    %c-1_i32_43 = arith.constant -1 : i32
    %139 = vector.broadcast %c-1_i32_43 : i32 to vector<1x512xi32>
    %140 = arith.cmpi sge, %1, %139 : vector<1x512xi32>
    %c15_i32_44 = arith.constant 15 : i32
    %141 = vector.broadcast %c15_i32_44 : i32 to vector<1x512xi32>
    %142 = arith.cmpi slt, %1, %141 : vector<1x512xi32>
    %143 = arith.andi %140, %142 : vector<1x512xi1>
    %c-1_i32_45 = arith.constant -1 : i32
    %144 = vector.broadcast %c-1_i32_45 : i32 to vector<1x512xi32>
    %145 = arith.cmpi sge, %2, %144 : vector<1x512xi32>
    %146 = arith.andi %143, %145 : vector<1x512xi1>
    %c15_i32_46 = arith.constant 15 : i32
    %147 = vector.broadcast %c15_i32_46 : i32 to vector<1x512xi32>
    %148 = arith.cmpi slt, %2, %147 : vector<1x512xi32>
    %149 = arith.andi %146, %148 : vector<1x512xi1>
    %150 = arith.extui %149 : vector<1x512xi1> to vector<1x512xi32>
    %151 = arith.sitofp %150 : vector<1x512xi32> to vector<1x512xf32>
    %152 = vector.broadcast %151 : vector<1x512xf32> to vector<4x512xf32>
    %153 = arith.mulf %138, %152 : vector<4x512xf32>
    %c32 = arith.constant 32 : index
    %c0_47 = arith.constant 0 : index
    %154 = vector.load %arg6[%c32, %c0_47] : memref<36x512xf32, #tpu.memory_space<vmem>>, vector<4x512xf32>
    tpu.vector_store %arg6[%c32, %c0_47], %153 {strides = array<i32>} : memref<36x512xf32, #tpu.memory_space<vmem>>, vector<4x512xf32>,
    %c0_48 = arith.constant 0 : index
    %c0_49 = arith.constant 0 : index
    %155 = vector.load %arg1[%c0_48, %c0_49] : memref<8x36xf32, #tpu.memory_space<vmem>>, vector<8x36xf32>
    %c0_50 = arith.constant 0 : index
    %c0_51 = arith.constant 0 : index
    %156 = vector.load %arg6[%c0_50, %c0_51] : memref<36x512xf32, #tpu.memory_space<vmem>>, vector<36x512xf32>
    %cst = arith.constant dense<0.000000e+00> : vector<8x512xf32>
    %157 = tpu.matmul %155, %156, %cst {dimension_numbers = #tpu.dot_dimension_numbers<[1], [0], [0], [1], [0, 0, 1, 1], [], []>} : vector<8x36xf32>, vector<36x512xf32>, vector<8x512xf32> -> vector<8x512xf32>
    %cst_52 = arith.constant 0.000000e+00 : f32
    %158 = vector.broadcast %cst_52 : f32 to vector<8x512xf32>
    %159 = arith.maximumf %157, %158 : vector<8x512xf32>
    %cst_53 = arith.constant dense<0.000000e+00> : vector<8xf32>
    %160 = vector.multi_reduction <add>, %159, %cst_53 [1] : vector<8x512xf32> to vector<8xf32>
    %161 = vector.shape_cast %160 : vector<8xf32> to vector<8x1xf32>
    %162 = arith.mulf %159, %159 : vector<8x512xf32>
    %cst_54 = arith.constant dense<0.000000e+00> : vector<8xf32>
    %163 = vector.multi_reduction <add>, %162, %cst_54 [1] : vector<8x512xf32> to vector<8xf32>
    %164 = vector.shape_cast %163 : vector<8xf32> to vector<8x1xf32>
    %cst_55 = arith.constant 0.001953125 : f32
    %165 = vector.broadcast %cst_55 : f32 to vector<8x1xf32>
    %166 = arith.mulf %161, %165 : vector<8x1xf32>
    %cst_56 = arith.constant 0.001953125 : f32
    %167 = vector.broadcast %cst_56 : f32 to vector<8x1xf32>
    %168 = arith.mulf %164, %167 : vector<8x1xf32>
    %169 = arith.mulf %166, %166 : vector<8x1xf32>
    %170 = arith.subf %168, %169 : vector<8x1xf32>
    %cst_57 = arith.constant 0.000000e+00 : f32
    %171 = vector.broadcast %cst_57 : f32 to vector<8x1xf32>
    %172 = arith.maximumf %170, %171 : vector<8x1xf32>
    %c0_58 = arith.constant 0 : index
    %c0_59 = arith.constant 0 : index
    %173 = vector.load %arg3[%c0_58, %c0_59] : memref<8x1xf32, #tpu.memory_space<vmem>>, vector<8x1xf32>
    %cst_60 = arith.constant 9.99999974E-6 : f32
    %174 = vector.broadcast %cst_60 : f32 to vector<8x1xf32>
    %175 = arith.addf %172, %174 : vector<8x1xf32>
    %176 = math.rsqrt %175 : vector<8x1xf32>
    %177 = arith.mulf %173, %176 : vector<8x1xf32>
    %c0_61 = arith.constant 0 : index
    %c0_62 = arith.constant 0 : index
    %178 = vector.load %arg4[%c0_61, %c0_62] : memref<8x1xf32, #tpu.memory_space<vmem>>, vector<8x1xf32>
    %179 = arith.mulf %166, %177 : vector<8x1xf32>
    %180 = arith.subf %178, %179 : vector<8x1xf32>
    %181 = vector.broadcast %177 : vector<8x1xf32> to vector<8x512xf32>
    %182 = arith.mulf %159, %181 : vector<8x512xf32>
    %183 = vector.broadcast %180 : vector<8x1xf32> to vector<8x512xf32>
    %184 = arith.addf %182, %183 : vector<8x512xf32>
    %c0_63 = arith.constant 0 : index
    %c0_64 = arith.constant 0 : index
    %185 = vector.load %arg5[%c0_63, %c0_64] : memref<8x512xf32, #tpu.memory_space<vmem>>, vector<8x512xf32>
    tpu.vector_store %arg5[%c0_63, %c0_64], %184 {strides = array<i32>} : memref<8x512xf32, #tpu.memory_space<vmem>>, vector<8x512xf32>,
    return
  }
}

</mosaic_0001>

<llo_original>
// kernel: basic_conv2d.1
$region0: #{basic_conv2d.1}
  #allocation0 [shape = 'u32[]', space=smem, size = 0x4, offset = 0x4, fixed_abs, tag = 'smem constant byte address 0x4 - core index']
  #allocation1 [shape = 'u32[72,128]{1,0:T(1,128)}', space=vmem, size = 0x9000, scoped, tag = 'internal scratch']
  #allocation2 [shape = 'f32[36,512]{1,0:T(8,128)}', space=vmem, size = 0x14000, scoped, tag = 'scratch operand']
  %s0 = inlined_call_operand.vmem [shape: f32[4,512], index: 0, kind: input, shape index: {}]
  %s1 = inlined_call_operand.vmem [shape: f32[8,36], index: 1, kind: input, shape index: {}]
  %s2 = inlined_call_operand.vmem [shape: s32[2,512], index: 2, kind: input, shape index: {}]
  %s3 = inlined_call_operand.vmem [shape: f32[8,1], index: 3, kind: input, shape index: {}]
  %s4 = inlined_call_operand.vmem [shape: f32[8,1], index: 4, kind: input, shape index: {}]
  %s5 = inlined_call_operand.vmem [shape: f32[8,512], index: 5, kind: output, shape index: {}]
  %s6 = sld [smem:[#allocation0]]
  $region30: #{basic_conv2d.1} parent=0
    _
  %s8 = ssub.s32 1, %s6
  %s9 = scalar_select 0, %s8, %s6
  // Predicated region
  $region2: #{basic_conv2d.1} parent=0 // pred_check
    _
  $region3: #{basic_conv2d.1} parent=0 // pred_check_branch
    %11 = sbr.rel (0) target = $region5
  $region4: #{basic_conv2d.1} parent=0 // pred_region
    _
  $region5: #{basic_conv2d.1} parent=0 // pred_fallthru
    _
  // Predicated region
  $region6: #{basic_conv2d.1} parent=0 // pred_check
    _
  $region7: #{basic_conv2d.1} parent=0 // pred_check_branch
    %13 = sbr.rel (0) target = $region9
  $region8: #{basic_conv2d.1} parent=0 // pred_region
    _
  $region9: #{basic_conv2d.1} parent=0 // pred_fallthru
    _
  // Predicated region
  $region10: #{basic_conv2d.1} parent=0 // pred_check
    _
  $region11: #{basic_conv2d.1} parent=0 // pred_check_branch
    %15 = sbr.rel (0) target = $region13
  $region12: #{basic_conv2d.1} parent=0 // pred_region
    _
  $region13: #{basic_conv2d.1} parent=0 // pred_fallthru
    _
  // Predicated region
  $region14: #{basic_conv2d.1} parent=0 // pred_check
    _
  $region15: #{basic_conv2d.1} parent=0 // pred_check_branch
    %17 = sbr.rel (0) target = $region17
  $region16: #{basic_conv2d.1} parent=0 // pred_region
    _
  $region17: #{basic_conv2d.1} parent=0 // pred_fallthru
    _
  // Predicated region
  $region18: #{basic_conv2d.1} parent=0 // pred_check
    _
  $region19: #{basic_conv2d.1} parent=0 // pred_check_branch
    %19 = sbr.rel (0) target = $region21
  $region20: #{basic_conv2d.1} parent=0 // pred_region
    _
  $region21: #{basic_conv2d.1} parent=0 // pred_fallthru
    _
  %v20 = vld [vmem:[%s0] sm:$0xff]
  %v21 = vld [vmem:[%s0 + $0x8] sm:$0xff]
  %v22 = vld [vmem:[%s2] ss:$2 sm:$0xf]
  %s23 = scalar_lea.vmem %s2, 1
  %v24 = vld [vmem:[%s23] ss:$2 sm:$0xf]
  %27 = vst [vmem:[#allocation1] ss:$2 sm:$0xff] %v20
  %s28 = scalar_lea.vmem [#allocation1], 16
  %29 = vst [vmem:[%s28] ss:$2 sm:$0xff] %v21
  %v30 = vld.sshfl [vmem:[#allocation1] sm:$0xff pattern:$0x75316420]
  %v31 = vld.sshfl [vmem:[#allocation1 + $0x8] sm:$0xff pattern:$0x75316420]
  %v32 = vld.sshfl [vmem:[#allocation1 + $0x10] sm:$0xff pattern:$0x75316420]
  %v33 = vld.sshfl [vmem:[#allocation1 + $0x18] sm:$0xff pattern:$0x75316420]
  %38 = vrot.lane.b32.xlu0 %v30, 17
  %v39 = vpop.permute.xlu0 %38
  %40 = vrot.lane.b32.xlu0 %v31, 17
  %v41 = vpop.permute.xlu0 %40
  %42 = vrot.lane.b32.xlu0 %v32, 17
  %v43 = vpop.permute.xlu0 %42
  %44 = vrot.lane.b32.xlu0 %v33, 17
  %v45 = vpop.permute.xlu0 %44
  %v46 = vlaneseq
  %v47 = vand.u32 %v46, 127
  %vm48 = vcmp.lt.s32.totalorder %v47, 17
  %v49 = vsel %vm48, %v43, %v45
  %v50 = vsel %vm48, %v41, %v43
  %v51 = vsel %vm48, %v39, %v41
  %v52 = vsel %vm48, %v45, %v39
  %vm53 = vcmp.ge.s32.totalorder %v22, 1
  %vm54 = vcmp.lt.s32.totalorder %v22, 17
  %vm55 = vmand %vm53, %vm54
  %vm56 = vcmp.ge.s32.totalorder %v24, 1
  %vm57 = vmand %vm55, %vm56
  %vm58 = vcmp.lt.s32.totalorder %v24, 17
  %vm59 = vmand %vm57, %vm58
  %v60 = vsel %vm59, 1, 0
  %v61 = vcvt.s32.f32 %v60
  %v63 = vperm.slane %v61, 0
  %v64 = vperm.slane %v61, 1
  %v65 = vperm.slane %v61, 2
  %v66 = vperm.slane %v61, 3
  %v71 = vmul.f32 %v52, %v63
  %v72 = vmul.f32 %v51, %v64
  %v73 = vmul.f32 %v50, %v65
  %v74 = vmul.f32 %v49, %v66
  %75 = vst [vmem:[#allocation2] sm:$0xf] %v71
  %76 = vst [vmem:[#allocation2 + $0x8] sm:$0xf] %v72
  %77 = vst [vmem:[#allocation2 + $0x10] sm:$0xf] %v73
  %78 = vst [vmem:[#allocation2 + $0x18] sm:$0xf] %v74
  %79 = vst [vmem:[#allocation1] ss:$2 sm:$0xff] %v20
  %s80 = scalar_lea.vmem [#allocation1], 16
  %81 = vst [vmem:[%s80] ss:$2 sm:$0xff] %v21
  %v82 = vld.sshfl [vmem:[#allocation1] sm:$0xff pattern:$0x75316420]
  %v83 = vld.sshfl [vmem:[#allocation1 + $0x8] sm:$0xff pattern:$0x75316420]
  %v84 = vld.sshfl [vmem:[#allocation1 + $0x10] sm:$0xff pattern:$0x75316420]
  %v85 = vld.sshfl [vmem:[#allocation1 + $0x18] sm:$0xff pattern:$0x75316420]
  %90 = vrot.lane.b32.xlu0 %v82, 16
  %v91 = vpop.permute.xlu0 %90
  %92 = vrot.lane.b32.xlu0 %v83, 16
  %v93 = vpop.permute.xlu0 %92
  %94 = vrot.lane.b32.xlu0 %v84, 16
  %v95 = vpop.permute.xlu0 %94
  %96 = vrot.lane.b32.xlu0 %v85, 16
  %v97 = vpop.permute.xlu0 %96
  %vm98 = vcmp.lt.s32.totalorder %v47, 16
  %v99 = vsel %vm98, %v95, %v97
  %v100 = vsel %vm98, %v93, %v95
  %v101 = vsel %vm98, %v91, %v93
  %v102 = vsel %vm98, %v97, %v91
  %vm103 = vcmp.ge.s32.totalorder %v24, 0
  %vm104 = vmand %vm55, %vm103
  %vm105 = vcmp.lt.s32.totalorder %v24, 16
  %vm106 = vmand %vm104, %vm105
  %v107 = vsel %vm106, 1, 0
  %v108 = vcvt.s32.f32 %v107
  %v110 = vperm.slane %v108, 0
  %v111 = vperm.slane %v108, 1
  %v112 = vperm.slane %v108, 2
  %v113 = vperm.slane %v108, 3
  %v118 = vmul.f32 %v102, %v110
  %v119 = vmul.f32 %v101, %v111
  %v120 = vmul.f32 %v100, %v112
  %v121 = vmul.f32 %v99, %v113
  %v126 = vrot.slane %v118, 4
  %v127 = vrot.slane %v119, 4
  %v128 = vrot.slane %v120, 4
  %v129 = vrot.slane %v121, 4
  %134 = vst [vmem:[#allocation2] sm:$0xf0] %v126
  %135 = vst [vmem:[#allocation2 + $0x8] sm:$0xf0] %v127
  %136 = vst [vmem:[#allocation2 + $0x10] sm:$0xf0] %v128
  %137 = vst [vmem:[#allocation2 + $0x18] sm:$0xf0] %v129
  %138 = vst [vmem:[#allocation1] ss:$2 sm:$0xff] %v20
  %s139 = scalar_lea.vmem [#allocation1], 16
  %140 = vst [vmem:[%s139] ss:$2 sm:$0xff] %v21
  %v141 = vld.sshfl [vmem:[#allocation1] sm:$0xff pattern:$0x75316420]
  %v142 = vld.sshfl [vmem:[#allocation1 + $0x8] sm:$0xff pattern:$0x75316420]
  %v143 = vld.sshfl [vmem:[#allocation1 + $0x10] sm:$0xff pattern:$0x75316420]
  %v144 = vld.sshfl [vmem:[#allocation1 + $0x18] sm:$0xff pattern:$0x75316420]
  %149 = vrot.lane.b32.xlu0 %v141, 15
  %v150 = vpop.permute.xlu0 %149
  %151 = vrot.lane.b32.xlu0 %v142, 15
  %v152 = vpop.permute.xlu0 %151
  %153 = vrot.lane.b32.xlu0 %v143, 15
  %v154 = vpop.permute.xlu0 %153
  %155 = vrot.lane.b32.xlu0 %v144, 15
  %v156 = vpop.permute.xlu0 %155
  %vm157 = vcmp.lt.s32.totalorder %v47, 15
  %v158 = vsel %vm157, %v154, %v156
  %v159 = vsel %vm157, %v152, %v154
  %v160 = vsel %vm157, %v150, %v152
  %v161 = vsel %vm157, %v156, %v150
  %vm162 = vcmp.ge.s32.totalorder %v24, 4294967295
  %vm163 = vmand %vm55, %vm162
  %vm164 = vcmp.lt.s32.totalorder %v24, 15
  %vm165 = vmand %vm163, %vm164
  %v166 = vsel %vm165, 1, 0
  %v167 = vcvt.s32.f32 %v166
  %v169 = vperm.slane %v167, 0
  %v170 = vperm.slane %v167, 1
  %v171 = vperm.slane %v167, 2
  %v172 = vperm.slane %v167, 3
  %v177 = vmul.f32 %v161, %v169
  %v178 = vmul.f32 %v160, %v170
  %v179 = vmul.f32 %v159, %v171
  %v180 = vmul.f32 %v158, %v172
  %181 = vst [vmem:[#allocation2 + $0x20] sm:$0xf] %v177
  %182 = vst [vmem:[#allocation2 + $0x28] sm:$0xf] %v178
  %183 = vst [vmem:[#allocation2 + $0x30] sm:$0xf] %v179
  %184 = vst [vmem:[#allocation2 + $0x38] sm:$0xf] %v180
  %185 = vst [vmem:[#allocation1] ss:$2 sm:$0xff] %v20
  %s186 = scalar_lea.vmem [#allocation1], 16
  %187 = vst [vmem:[%s186] ss:$2 sm:$0xff] %v21
  %v188 = vld.sshfl [vmem:[#allocation1] sm:$0xff pattern:$0x75316420]
  %v189 = vld.sshfl [vmem:[#allocation1 + $0x8] sm:$0xff pattern:$0x75316420]
  %v190 = vld.sshfl [vmem:[#allocation1 + $0x10] sm:$0xff pattern:$0x75316420]
  %v191 = vld.sshfl [vmem:[#allocation1 + $0x18] sm:$0xff pattern:$0x75316420]
  %196 = vrot.lane.b32.xlu0 %v188, 1
  %v197 = vpop.permute.xlu0 %196
  %198 = vrot.lane.b32.xlu0 %v189, 1
  %v199 = vpop.permute.xlu0 %198
  %200 = vrot.lane.b32.xlu0 %v190, 1
  %v201 = vpop.permute.xlu0 %200
  %202 = vrot.lane.b32.xlu0 %v191, 1
  %v203 = vpop.permute.xlu0 %202
  %vm204 = vcmp.lt.s32.totalorder %v47, 1
  %v205 = vsel %vm204, %v201, %v203
  %v206 = vsel %vm204, %v199, %v201
  %v207 = vsel %vm204, %v197, %v199
  %v208 = vsel %vm204, %v203, %v197
  %vm209 = vcmp.ge.s32.totalorder %v22, 0
  %vm210 = vcmp.lt.s32.totalorder %v22, 16
  %vm211 = vmand %vm209, %vm210
  %vm212 = vmand %vm211, %vm56
  %vm213 = vmand %vm212, %vm58
  %v214 = vsel %vm213, 1, 0
  %v215 = vcvt.s32.f32 %v214
  %v217 = vperm.slane %v215, 0
  %v218 = vperm.slane %v215, 1
  %v219 = vperm.slane %v215, 2
  %v220 = vperm.slane %v215, 3
  %v225 = vmul.f32 %v208, %v217
  %v226 = vmul.f32 %v207, %v218
  %v227 = vmul.f32 %v206, %v219
  %v228 = vmul.f32 %v205, %v220
  %v233 = vrot.slane %v225, 4
  %v234 = vrot.slane %v226, 4
  %v235 = vrot.slane %v227, 4
  %v236 = vrot.slane %v228, 4
  %241 = vst [vmem:[#allocation2 + $0x20] sm:$0xf0] %v233
  %242 = vst [vmem:[#allocation2 + $0x28] sm:$0xf0] %v234
  %243 = vst [vmem:[#allocation2 + $0x30] sm:$0xf0] %v235
  %244 = vst [vmem:[#allocation2 + $0x38] sm:$0xf0] %v236
  %vm245 = vmand %vm211, %vm103
  %vm246 = vmand %vm245, %vm105
  %v247 = vsel %vm246, 1, 0
  %v248 = vcvt.s32.f32 %v247
  %v250 = vperm.slane %v248, 0
  %v251 = vperm.slane %v248, 1
  %v252 = vperm.slane %v248, 2
  %v253 = vperm.slane %v248, 3
  %v254 = vrot.slane %v251, 4
  %v255 = vrot.slane %v253, 4
  %vm256 = vcmask 1043456
  %v257 = vsel %vm256, %v250, %v254
  %v258 = vsel %vm256, %v252, %v255
  %v261 = vmul.f32 %v20, %v257
  %v262 = vmul.f32 %v21, %v258
  %265 = vst [vmem:[#allocation1] ss:$2 sm:$0xff] %v261
  %s266 = scalar_lea.vmem [#allocation1], 16
  %267 = vst [vmem:[%s266] ss:$2 sm:$0xff] %v262
  %v268 = vld.sshfl [vmem:[#allocation1] sm:$0xff pattern:$0x75316420]
  %v269 = vld.sshfl [vmem:[#allocation1 + $0x8] sm:$0xff pattern:$0x75316420]
  %v270 = vld.sshfl [vmem:[#allocation1 + $0x10] sm:$0xff pattern:$0x75316420]
  %v271 = vld.sshfl [vmem:[#allocation1 + $0x18] sm:$0xff pattern:$0x75316420]
  %276 = vst [vmem:[#allocation2 + $0x40] sm:$0xf] %v268
  %277 = vst [vmem:[#allocation2 + $0x48] sm:$0xf] %v269
  %278 = vst [vmem:[#allocation2 + $0x50] sm:$0xf] %v270
  %279 = vst [vmem:[#allocation2 + $0x58] sm:$0xf] %v271
  %280 = vst [vmem:[#allocation1] ss:$2 sm:$0xff] %v20
  %s281 = scalar_lea.vmem [#allocation1], 16
  %282 = vst [vmem:[%s281] ss:$2 sm:$0xff] %v21
  %v283 = vld.sshfl [vmem:[#allocation1] sm:$0xff pattern:$0x75316420]
  %v284 = vld.sshfl [vmem:[#allocation1 + $0x8] sm:$0xff pattern:$0x75316420]
  %v285 = vld.sshfl [vmem:[#allocation1 + $0x10] sm:$0xff pattern:$0x75316420]
  %v286 = vld.sshfl [vmem:[#allocation1 + $0x18] sm:$0xff pattern:$0x75316420]
  %291 = vrot.lane.b32.xlu0 %v283, 127
  %v292 = vpop.permute.xlu0 %291
  %293 = vrot.lane.b32.xlu0 %v284, 127
  %v294 = vpop.permute.xlu0 %293
  %295 = vrot.lane.b32.xlu0 %v285, 127
  %v296 = vpop.permute.xlu0 %295
  %297 = vrot.lane.b32.xlu0 %v286, 127
  %v298 = vpop.permute.xlu0 %297
  %vm299 = vcmp.lt.s32.totalorder %v47, 127
  %v300 = vsel %vm299, %v296, %v298
  %v301 = vsel %vm299, %v294, %v296
  %v302 = vsel %vm299, %v292, %v294
  %v303 = vsel %vm299, %v298, %v292
  %vm304 = vmand %vm211, %vm162
  %vm305 = vmand %vm304, %vm164
  %v306 = vsel %vm305, 1, 0
  %v307 = vcvt.s32.f32 %v306
  %v309 = vperm.slane %v307, 0
  %v310 = vperm.slane %v307, 1
  %v311 = vperm.slane %v307, 2
  %v312 = vperm.slane %v307, 3
  %v317 = vmul.f32 %v302, %v309
  %v318 = vmul.f32 %v301, %v310
  %v319 = vmul.f32 %v300, %v311
  %v320 = vmul.f32 %v303, %v312
  %v325 = vrot.slane %v317, 4
  %v326 = vrot.slane %v318, 4
  %v327 = vrot.slane %v319, 4
  %v328 = vrot.slane %v320, 4
  %333 = vst [vmem:[#allocation2 + $0x40] sm:$0xf0] %v325
  %334 = vst [vmem:[#allocation2 + $0x48] sm:$0xf0] %v326
  %335 = vst [vmem:[#allocation2 + $0x50] sm:$0xf0] %v327
  %336 = vst [vmem:[#allocation2 + $0x58] sm:$0xf0] %v328
  %337 = vst [vmem:[#allocation1] ss:$2 sm:$0xff] %v20
  %s338 = scalar_lea.vmem [#allocation1], 16
  %339 = vst [vmem:[%s338] ss:$2 sm:$0xff] %v21
  %v340 = vld.sshfl [vmem:[#allocation1] sm:$0xff pattern:$0x75316420]
  %v341 = vld.sshfl [vmem:[#allocation1 + $0x8] sm:$0xff pattern:$0x75316420]
  %v342 = vld.sshfl [vmem:[#allocation1 + $0x10] sm:$0xff pattern:$0x75316420]
  %v343 = vld.sshfl [vmem:[#allocation1 + $0x18] sm:$0xff pattern:$0x75316420]
  %348 = vrot.lane.b32.xlu0 %v340, 113
  %v349 = vpop.permute.xlu0 %348
  %350 = vrot.lane.b32.xlu0 %v341, 113
  %v351 = vpop.permute.xlu0 %350
  %352 = vrot.lane.b32.xlu0 %v342, 113
  %v353 = vpop.permute.xlu0 %352
  %354 = vrot.lane.b32.xlu0 %v343, 113
  %v355 = vpop.permute.xlu0 %354
  %vm356 = vcmp.lt.s32.totalorder %v47, 113
  %v357 = vsel %vm356, %v353, %v355
  %v358 = vsel %vm356, %v351, %v353
  %v359 = vsel %vm356, %v349, %v351
  %v360 = vsel %vm356, %v355, %v349
  %vm361 = vcmp.ge.s32.totalorder %v22, 4294967295
  %vm362 = vcmp.lt.s32.totalorder %v22, 15
  %vm363 = vmand %vm361, %vm362
  %vm364 = vmand %vm363, %vm56
  %vm365 = vmand %vm364, %vm58
  %v366 = vsel %vm365, 1, 0
  %v367 = vcvt.s32.f32 %v366
  %v369 = vperm.slane %v367, 0
  %v370 = vperm.slane %v367, 1
  %v371 = vperm.slane %v367, 2
  %v372 = vperm.slane %v367, 3
  %v377 = vmul.f32 %v359, %v369
  %v378 = vmul.f32 %v358, %v370
  %v379 = vmul.f32 %v357, %v371
  %v380 = vmul.f32 %v360, %v372
  %381 = vst [vmem:[#allocation2 + $0x60] sm:$0xf] %v377
  %382 = vst [vmem:[#allocation2 + $0x68] sm:$0xf] %v378
  %383 = vst [vmem:[#allocation2 + $0x70] sm:$0xf] %v379
  %384 = vst [vmem:[#allocation2 + $0x78] sm:$0xf] %v380
  %385 = vst [vmem:[#allocation1] ss:$2 sm:$0xff] %v20
  %s386 = scalar_lea.vmem [#allocation1], 16
  %387 = vst [vmem:[%s386] ss:$2 sm:$0xff] %v21
  %v388 = vld.sshfl [vmem:[#allocation1] sm:$0xff pattern:$0x75316420]
  %v389 = vld.sshfl [vmem:[#allocation1 + $0x8] sm:$0xff pattern:$0x75316420]
  %v390 = vld.sshfl [vmem:[#allocation1 + $0x10] sm:$0xff pattern:$0x75316420]
  %v391 = vld.sshfl [vmem:[#allocation1 + $0x18] sm:$0xff pattern:$0x75316420]
  %396 = vrot.lane.b32.xlu0 %v388, 112
  %v397 = vpop.permute.xlu0 %396
  %398 = vrot.lane.b32.xlu0 %v389, 112
  %v399 = vpop.permute.xlu0 %398
  %400 = vrot.lane.b32.xlu0 %v390, 112
  %v401 = vpop.permute.xlu0 %400
  %402 = vrot.lane.b32.xlu0 %v391, 112
  %v403 = vpop.permute.xlu0 %402
  %vm404 = vcmp.lt.s32.totalorder %v47, 112
  %v405 = vsel %vm404, %v401, %v403
  %v406 = vsel %vm404, %v399, %v401
  %v407 = vsel %vm404, %v397, %v399
  %v408 = vsel %vm404, %v403, %v397
  %vm409 = vmand %vm363, %vm103
  %vm410 = vmand %vm409, %vm105
  %v411 = vsel %vm410, 1, 0
  %v412 = vcvt.s32.f32 %v411
  %v414 = vperm.slane %v412, 0
  %v415 = vperm.slane %v412, 1
  %v416 = vperm.slane %v412, 2
  %v417 = vperm.slane %v412, 3
  %v422 = vmul.f32 %v407, %v414
  %v423 = vmul.f32 %v406, %v415
  %v424 = vmul.f32 %v405, %v416
  %v425 = vmul.f32 %v408, %v417
  %v430 = vrot.slane %v422, 4
  %v431 = vrot.slane %v423, 4
  %v432 = vrot.slane %v424, 4
  %v433 = vrot.slane %v425, 4
  %438 = vst [vmem:[#allocation2 + $0x60] sm:$0xf0] %v430
  %439 = vst [vmem:[#allocation2 + $0x68] sm:$0xf0] %v431
  %440 = vst [vmem:[#allocation2 + $0x70] sm:$0xf0] %v432
  %441 = vst [vmem:[#allocation2 + $0x78] sm:$0xf0] %v433
  %442 = vst [vmem:[#allocation1] ss:$2 sm:$0xff] %v20
  %s443 = scalar_lea.vmem [#allocation1], 16
  %444 = vst [vmem:[%s443] ss:$2 sm:$0xff] %v21
  %v445 = vld.sshfl [vmem:[#allocation1] sm:$0xff pattern:$0x75316420]
  %v446 = vld.sshfl [vmem:[#allocation1 + $0x8] sm:$0xff pattern:$0x75316420]
  %v447 = vld.sshfl [vmem:[#allocation1 + $0x10] sm:$0xff pattern:$0x75316420]
  %v448 = vld.sshfl [vmem:[#allocation1 + $0x18] sm:$0xff pattern:$0x75316420]
  %453 = vrot.lane.b32.xlu0 %v445, 111
  %v454 = vpop.permute.xlu0 %453
  %455 = vrot.lane.b32.xlu0 %v446, 111
  %v456 = vpop.permute.xlu0 %455
  %457 = vrot.lane.b32.xlu0 %v447, 111
  %v458 = vpop.permute.xlu0 %457
  %459 = vrot.lane.b32.xlu0 %v448, 111
  %v460 = vpop.permute.xlu0 %459
  %vm461 = vcmp.lt.s32.totalorder %v47, 111
  %v462 = vsel %vm461, %v458, %v460
  %v463 = vsel %vm461, %v456, %v458
  %v464 = vsel %vm461, %v454, %v456
  %v465 = vsel %vm461, %v460, %v454
  %vm466 = vmand %vm363, %vm162
  %vm467 = vmand %vm466, %vm164
  %v468 = vsel %vm467, 1, 0
  %v469 = vcvt.s32.f32 %v468
  %v471 = vperm.slane %v469, 0
  %v472 = vperm.slane %v469, 1
  %v473 = vperm.slane %v469, 2
  %v474 = vperm.slane %v469, 3
  %v479 = vmul.f32 %v464, %v471
  %v480 = vmul.f32 %v463, %v472
  %v481 = vmul.f32 %v462, %v473
  %v482 = vmul.f32 %v465, %v474
  %483 = vst [vmem:[#allocation2 + $0x80] sm:$0xf] %v479
  %484 = vst [vmem:[#allocation2 + $0x88] sm:$0xf] %v480
  %485 = vst [vmem:[#allocation2 + $0x90] sm:$0xf] %v481
  %486 = vst [vmem:[#allocation2 + $0x98] sm:$0xf] %v482
  %v487 = vld [vmem:[%s1] sm:$0xff]
  %v488 = vld [vmem:[#allocation2] sm:$0xff]
  %v489 = vld [vmem:[#allocation2 + $0x8] sm:$0xff]
  %v490 = vld [vmem:[#allocation2 + $0x10] sm:$0xff]
  %v491 = vld [vmem:[#allocation2 + $0x18] sm:$0xff]
  %v492 = vld [vmem:[#allocation2 + $0x20] sm:$0xff]
  %v493 = vld [vmem:[#allocation2 + $0x28] sm:$0xff]
  %v494 = vld [vmem:[#allocation2 + $0x30] sm:$0xff]
  %v495 = vld [vmem:[#allocation2 + $0x38] sm:$0xff]
  %v496 = vld [vmem:[#allocation2 + $0x40] sm:$0xff]
  %v497 = vld [vmem:[#allocation2 + $0x48] sm:$0xff]
  %v498 = vld [vmem:[#allocation2 + $0x50] sm:$0xff]
  %v499 = vld [vmem:[#allocation2 + $0x58] sm:$0xff]
  %v500 = vld [vmem:[#allocation2 + $0x60] sm:$0xff]
  %v501 = vld [vmem:[#allocation2 + $0x68] sm:$0xff]
  %v502 = vld [vmem:[#allocation2 + $0x70] sm:$0xff]
  %v503 = vld [vmem:[#allocation2 + $0x78] sm:$0xff]
  %v504 = vld [vmem:[#allocation2 + $0x80] sm:$0xf]
  %v505 = vld [vmem:[#allocation2 + $0x88] sm:$0xf]
  %v506 = vld [vmem:[#allocation2 + $0x90] sm:$0xf]
  %v507 = vld [vmem:[#allocation2 + $0x98] sm:$0xf]
  %vm508 = vcmask 293888
  %v510 = vsel %vm508, %v487, 0
  %v513 = vsel %vm256, %v504, 0
  %v516 = vsel %vm256, %v505, 0
  %v519 = vsel %vm256, %v506, 0
  %v522 = vsel %vm256, %v507, 0
  %524 = vmatpush.msra.mxu0 0.0
  %525 = vmatpush.msra.mxu0 0.0
  %526 = vmatpush.msra.mxu0 0.0
  %527 = vmatpush.msra.mxu0 0.0
  %528 = vmatpush.msra.mxu0 0.0
  %529 = vmatpush.msra.mxu0 0.0
  %530 = vmatpush.msra.mxu0 0.0
  %531 = vmatpush.msra.mxu0 0.0
  %532 = vmatpush.msra.mxu0 0.0
  %533 = vmatpush.msra.mxu0 0.0
  %534 = vmatpush.msra.mxu0 0.0
  %535 = vmatpush.msra.mxu0 %v513
  %536 = vmatpush.msra.mxu0 %v500
  %537 = vmatpush.msra.mxu0 %v496
  %538 = vmatpush.msra.mxu0 %v492
  %539 = vmatpush.msra.mxu0 %v488
  %540 = vmatmul.f32.gmra.mxu0 %v510
  %v541 = vpop.f32.mrf.mxu0
  %v542 = vadd.f32 0.0, %v541
  %543 = vdwg.mxu0
  %544 = vmatpush.msra.mxu0 0.0
  %545 = vmatpush.msra.mxu0 0.0
  %546 = vmatpush.msra.mxu0 0.0
  %547 = vmatpush.msra.mxu0 0.0
  %548 = vmatpush.msra.mxu0 0.0
  %549 = vmatpush.msra.mxu0 0.0
  %550 = vmatpush.msra.mxu0 0.0
  %551 = vmatpush.msra.mxu0 0.0
  %552 = vmatpush.msra.mxu0 0.0
  %553 = vmatpush.msra.mxu0 0.0
  %554 = vmatpush.msra.mxu0 0.0
  %555 = vmatpush.msra.mxu0 %v516
  %556 = vmatpush.msra.mxu0 %v501
  %557 = vmatpush.msra.mxu0 %v497
  %558 = vmatpush.msra.mxu0 %v493
  %559 = vmatpush.msra.mxu0 %v489
  %560 = vmatmul.f32.gmra.mxu0 %v510
  %v561 = vpop.f32.mrf.mxu0
  %v562 = vadd.f32 0.0, %v561
  %563 = vdwg.mxu0
  %564 = vmatpush.msra.mxu0 0.0
  %565 = vmatpush.msra.mxu0 0.0
  %566 = vmatpush.msra.mxu0 0.0
  %567 = vmatpush.msra.mxu0 0.0
  %568 = vmatpush.msra.mxu0 0.0
  %569 = vmatpush.msra.mxu0 0.0
  %570 = vmatpush.msra.mxu0 0.0
  %571 = vmatpush.msra.mxu0 0.0
  %572 = vmatpush.msra.mxu0 0.0
  %573 = vmatpush.msra.mxu0 0.0
  %574 = vmatpush.msra.mxu0 0.0
  %575 = vmatpush.msra.mxu0 %v519
  %576 = vmatpush.msra.mxu0 %v502
  %577 = vmatpush.msra.mxu0 %v498
  %578 = vmatpush.msra.mxu0 %v494
  %579 = vmatpush.msra.mxu0 %v490
  %580 = vmatmul.f32.gmra.mxu0 %v510
  %v581 = vpop.f32.mrf.mxu0
  %v582 = vadd.f32 0.0, %v581
  %583 = vdwg.mxu0
  %584 = vmatpush.msra.mxu0 0.0
  %585 = vmatpush.msra.mxu0 0.0
  %586 = vmatpush.msra.mxu0 0.0
  %587 = vmatpush.msra.mxu0 0.0
  %588 = vmatpush.msra.mxu0 0.0
  %589 = vmatpush.msra.mxu0 0.0
  %590 = vmatpush.msra.mxu0 0.0
  %591 = vmatpush.msra.mxu0 0.0
  %592 = vmatpush.msra.mxu0 0.0
  %593 = vmatpush.msra.mxu0 0.0
  %594 = vmatpush.msra.mxu0 0.0
  %595 = vmatpush.msra.mxu0 %v522
  %596 = vmatpush.msra.mxu0 %v503
  %597 = vmatpush.msra.mxu0 %v499
  %598 = vmatpush.msra.mxu0 %v495
  %599 = vmatpush.msra.mxu0 %v491
  %600 = vmatmul.f32.gmra.mxu0 %v510
  %v601 = vpop.f32.mrf.mxu0
  %v602 = vadd.f32 0.0, %v601
  %603 = vdwg.mxu0
  %v604 = vmax.f32 %v542, 0.0
  %v605 = vmax.f32 %v562, 0.0
  %v606 = vmax.f32 %v582, 0.0
  %v607 = vmax.f32 %v602, 0.0
  %v608 = vadd.f32 %v604, %v605
  %v609 = vadd.f32 %v608, %v606
  %v610 = vadd.f32 %v609, %v607
  %611 = vadd.xlane.f32.xlu0 %v610
  %v612 = vpop.xlane.xlu0 %611
  %v613 = vmul.f32 %v604, %v604
  %v614 = vmul.f32 %v605, %v605
  %v615 = vmul.f32 %v606, %v606
  %v616 = vmul.f32 %v607, %v607
  %v617 = vadd.f32 %v613, %v614
  %v618 = vadd.f32 %v617, %v615
  %v619 = vadd.f32 %v618, %v616
  %620 = vadd.xlane.f32.xlu0 %v619
  %v621 = vpop.xlane.xlu0 %620
  %v622 = vmul.f32 %v612, 0.001953125
  %v623 = vmul.f32 %v621, 0.001953125
  %v624 = vmul.f32 %v622, %v622
  %v625 = vsub.f32 %v623, %v624
  %v626 = vmax.f32 %v625, 0.0
  %v627 = vld [vmem:[%s3] sm:$0xff]
  %v628 = vadd.f32 %v626, 1e-05
  %v629 = vrsqrt.pop %v628
  %v630 = vmul.f32 %v629, %v628
  %v631 = vmul.f32 %v630, %v629
  %v632 = vmul.f32 0.5, %v631
  %v633 = vsub.f32 1.5, %v632
  %v634 = vmul.f32 %v629, %v633
  %vm635 = vweird.f32 %v628
  %vm636 = vweird.f32 %v629
  %vm637 = vmor %vm635, %vm636
  %v638 = vsel %vm637, %v629, %v634
  %v639 = vmul.f32 %v627, %v638
  %v640 = vld [vmem:[%s4] sm:$0xff]
  %v641 = vmul.f32 %v622, %v639
  %v642 = vsub.f32 %v640, %v641
  %644 = vset.pattern.permute.xlu0 0
  %645 = vperm.xlu0 %644, %v639
  %v646 = vpop.permute.xlu0 %645
  %v648 = vmul.f32 %v604, %v646
  %v649 = vmul.f32 %v605, %v646
  %v650 = vmul.f32 %v606, %v646
  %v651 = vmul.f32 %v607, %v646
  %653 = vset.pattern.permute.xlu0 0
  %654 = vperm.xlu0 %653, %v642
  %v655 = vpop.permute.xlu0 %654
  %v657 = vadd.f32 %v648, %v655
  %v658 = vadd.f32 %v649, %v655
  %v659 = vadd.f32 %v650, %v655
  %v660 = vadd.f32 %v651, %v655
  %661 = vst [vmem:[%s5] sm:$0xff] %v657
  %662 = vst [vmem:[%s5 + $0x8] sm:$0xff] %v658
  %663 = vst [vmem:[%s5 + $0x10] sm:$0xff] %v659
  %664 = vst [vmem:[%s5 + $0x18] sm:$0xff] %v660
  // Predicated region
  $region22: #{basic_conv2d.1} parent=0 // pred_check
    _
  $region23: #{basic_conv2d.1} parent=0 // pred_check_branch
    %666 = sbr.rel (0) target = $region25
  $region24: #{basic_conv2d.1} parent=0 // pred_region
    _
  $region25: #{basic_conv2d.1} parent=0 // pred_fallthru
    _
  // Predicated region
  $region26: #{basic_conv2d.1} parent=0 // pred_check
    _
  $region27: #{basic_conv2d.1} parent=0 // pred_check_branch
    %668 = sbr.rel (0) target = $region29
  $region28: #{basic_conv2d.1} parent=0 // pred_region
    _
  $region29: #{basic_conv2d.1} parent=0 // pred_fallthru
    _

</llo_original>
